<compile_context>
chip_gen: v7x
topology: tpu7x:2x2x1
jax: 0.10.0
libtpu: 0.0.40
codegen_flags: <defaults>
</compile_context>

<pallas_src>
import jax
import jax.numpy as jnp
from jax.experimental import pallas as pl
from jax.experimental.pallas import tpu as pltpu


H1, H2 = 64, 32  # hidden widths fixed by the module


def mlp_kernel(xt_ref, w1_ref, w2_ref, c_ref, o_ref):
    # Unpack the fused small-constant operand (sublane-packed; every slice offset is a
    # multiple of 8, so these are relayout-free static value slices).
    c = c_ref[...]                                   # (136, 1) f32
    b1 = c[0:H1, :]                                  # (64, 1)
    b2 = c[H1:H1 + H2, :]                            # (32, 1)
    w3 = c[H1 + H2:H1 + 2 * H2, :]                   # (32, 1)
    b3 = c[H1 + 2 * H2:H1 + 2 * H2 + 1, :]           # (1, 1)

    # Layer 1: (64,F)bf16 @ (F,TB)bf16 -> f32 accum on the MXU; bias + ReLU on the VPU.
    h1 = jnp.dot(w1_ref[...], xt_ref[...], preferred_element_type=jnp.float32)
    h1 = jnp.maximum(h1 + b1, 0.0)
    # Dropout (eval) == identity.
    # Layer 2: (32,64)bf16 @ (64,TB)bf16 -> f32 accum; bias + ReLU on the VPU.
    h2 = jnp.dot(w2_ref[...], h1.astype(jnp.bfloat16), preferred_element_type=jnp.float32)
    h2 = jnp.maximum(h2 + b2, 0.0)
    # Dropout (eval) == identity.
    # Layer 3: tiny matvec kept off the (saturated) MXU -- VPU multiply + sublane reduce.
    logits = jnp.sum(h2 * w3, axis=0, keepdims=True) + b3
    o_ref[...] = logits.astype(o_ref.dtype)          # (1, TB) lane-dense full-width store


def mlp_forward(x, params, *, block_b=None):
    w1, b1, w2, b2, w3c, b3 = params   # w1:(64,F) b1:(64,1) w2:(32,64) b2:(32,1) w3c:(32,1) b3:(1,1)
    B, F = x.shape
    assert w1.shape == (H1, F) and w2.shape == (H2, H1)

    def round_up(v, m):
        return ((v + m - 1) // m) * m

    MIN_TB = 256      # minimum batch tile (half an MXU push on v6e/v7x; fine on v5e)
    ALIGN = 512       # preferred tile multiple: fills the 256-lane MXU output on v6e/v7x
    MAX_TB = 8192     # absolute cap; per-step overhead is already <10% well before this

    # Generation-aware VMEM capacity (v5e/v6e: 128 MiB, v7x: 64 MiB per TensorCore).
    try:
        vmem_cap = int(pltpu.get_tpu_info().vmem_capacity_bytes)
    except Exception:
        vmem_cap = 64 * 1024 * 1024   # conservative fallback (v7x-sized)

    # VMEM bytes of the tile working set, per batch element:
    #   double-buffered bf16 x^T tile + double-buffered (8-sublane padded) f32 out row
    #   + f32 h1/h2 intermediates.
    per_elem = 2 * (F * 2) + 2 * (8 * 4) + 4 * (H1 + H2)
    budget = max(4 * 1024 * 1024, min(vmem_cap * 3 // 8, 64 * 1024 * 1024))
    tb_vmem = max(MIN_TB, (budget // per_elem) // ALIGN * ALIGN)

    if block_b is not None:
        tb = int(block_b)
    else:
        # Aim for >= 2 grid tiles (keeps both v7x TensorCores busy), snap large tiles to
        # 512-lane multiples, then clamp by the VMEM-derived and absolute caps.
        tb = round_up(pl.cdiv(B, 2), MIN_TB)
        if tb > ALIGN:
            tb = round_up(tb, ALIGN)
        tb = max(MIN_TB, min(MAX_TB, tb_vmem, tb))

    n_tiles = pl.cdiv(B, tb)
    b_pad = n_tiles * tb

    # Present x transposed (batch on lanes) in bf16; pad+cast+transpose is a single fused
    # XLA copy ahead of the kernel.
    # TODO(synk): for very large B, stream (tb, F) f32 blocks and do the bf16 cast + relayout
    # in-kernel (idle VPU/XLU slots) to cut x HBM traffic from ~8 B/elem to ~4 B/elem.
    xt = jnp.pad(x, ((0, b_pad - B), (0, 0))).astype(jnp.bfloat16).T   # (F, b_pad) bf16
    w1_bf = w1.astype(jnp.bfloat16)
    w2_bf = w2.astype(jnp.bfloat16)

    # Pack the tiny constants (b1, b2, w3 column, b3) into ONE sublane-major f32 operand:
    # a single BlockSpec / prologue DMA instead of four.
    c_len = H1 + 2 * H2 + 1                      # 129
    c_pad = round_up(c_len, 8)                   # 136
    consts = jnp.concatenate(
        [b1.astype(jnp.float32), b2.astype(jnp.float32),
         w3c.astype(jnp.float32), b3.astype(jnp.float32),
         jnp.zeros((c_pad - c_len, 1), jnp.float32)], axis=0)          # (136, 1)

    approx_vmem = (per_elem * tb                       # streamed tile working set
                   + 2 * (H1 * F + H2 * H1) * 2        # resident bf16 weights (x2 buffers)
                   + 2 * c_pad * 128 * 4               # packed consts (lane-padded, x2 buffers)
                   + 512 * 1024)                       # layout / scheduling slack
    vmem_limit = int(min(vmem_cap * 3 // 4, max(16 * 1024 * 1024, 2 * approx_vmem)))

    flops = 2 * b_pad * (F * H1 + H1 * H2 + H2)
    bytes_accessed = int(xt.size * 2 + b_pad * 4
                         + w1_bf.size * 2 + w2_bf.size * 2 + consts.size * 4)

    out_row = pl.pallas_call(
        mlp_kernel,
        out_shape=jax.ShapeDtypeStruct((1, b_pad), jnp.float32),
        grid=(n_tiles,),
        in_specs=[
            pl.BlockSpec((F, tb), lambda i: (0, i)),        # streamed x^T tile
            pl.BlockSpec((H1, F), lambda i: (0, 0)),        # resident W1
            pl.BlockSpec((H2, H1), lambda i: (0, 0)),       # resident W2
            pl.BlockSpec((c_pad, 1), lambda i: (0, 0)),     # resident packed b1/b2/w3/b3
        ],
        out_specs=pl.BlockSpec((1, tb), lambda i: (0, i)),  # lane-dense logits row
        compiler_params=pltpu.CompilerParams(
            dimension_semantics=("parallel",),              # shard batch tiles across TCs (v7x)
            vmem_limit_bytes=vmem_limit,
        ),
        cost_estimate=pl.CostEstimate(
            flops=flops, transcendentals=0, bytes_accessed=bytes_accessed),
    )(xt, w1_bf, w2_bf, consts)

    return out_row[0, :B].reshape(B, 1)


def init_params(key, num_features):
    # Deterministic init mimicking torch.nn.Linear default: U(-1/sqrt(in), 1/sqrt(in)).
    ks = jax.random.split(key, 6)

    def linear(kw, kb, fan_in, fan_out):
        bound = 1.0 / (fan_in ** 0.5)
        w = jax.random.uniform(kw, (fan_out, fan_in), jnp.float32, -bound, bound)  # torch (out, in)
        b = jax.random.uniform(kb, (fan_out, 1), jnp.float32, -bound, bound)       # bias column
        return w, b

    w1, b1 = linear(ks[0], ks[1], num_features, 64)
    w2, b2 = linear(ks[2], ks[3], 64, 32)
    w3, b3 = linear(ks[4], ks[5], 32, 1)
    return (w1, b1, w2, b2, w3.T, b3)   # w3 stored as a (32, 1) column


def mlp_reference(x, params):
    w1, b1, w2, b2, w3c, b3 = params
    h1 = jnp.maximum(x @ w1.T + b1[:, 0], 0.0)
    h2 = jnp.maximum(h1 @ w2.T + b2[:, 0], 0.0)
    return h2 @ w3c + b3[0, 0]


if __name__ == "__main__":
    num_features = 16
    batch = 8

    key = jax.random.PRNGKey(0)
    k_x, k_p = jax.random.split(key)
    x = jax.random.normal(k_x, (batch, num_features), jnp.float32)
    params = init_params(k_p, num_features)

    out = jax.block_until_ready(mlp_forward(x, params))
    ref = mlp_reference(x, params)

    assert out.shape == (batch, 1), out.shape
    # bf16 activations/weights on the MXU path -> compare against f32 reference with loose tol.
    assert jnp.allclose(out, ref, atol=1e-2, rtol=1e-2), (out, ref)

    print("KERNEL_OK")
</pallas_src>

<mosaic_0001>
module attributes {stable_mosaic.version = 11 : i64} {
  func.func @mlp_kernel(%arg0: i32, %arg1: memref<16x256xbf16, #tpu.memory_space<vmem>>, %arg2: memref<64x16xbf16, #tpu.memory_space<vmem>>, %arg3: memref<32x64xbf16, #tpu.memory_space<vmem>>, %arg4: memref<136x1xf32, #tpu.memory_space<vmem>>, %arg5: memref<1x256xf32, #tpu.memory_space<vmem>>) attributes {dimension_semantics = [#tpu.dimension_semantics<parallel>], iteration_bounds = array<i64: 1>, scalar_prefetch = 0 : i64, scratch_operands = 0 : i64, tpu.core_type = #tpu.core_type<tc>, window_params = [{transform_indices = @transform_0, window_bounds = array<i64: 16, 256>}, {pipeline_mode = #tpu.pipeline_mode<synchronous>, transform_indices = @transform_1, window_bounds = array<i64: 64, 16>}, {pipeline_mode = #tpu.pipeline_mode<synchronous>, transform_indices = @transform_2, window_bounds = array<i64: 32, 64>}, {pipeline_mode = #tpu.pipeline_mode<synchronous>, transform_indices = @transform_3, window_bounds = array<i64: 136, 1>}, {transform_indices = @transform_4, window_bounds = array<i64: 1, 256>}]} {
    %c0 = arith.constant 0 : index
    %c0_0 = arith.constant 0 : index
    %0 = vector.load %arg4[%c0, %c0_0] : memref<136x1xf32, #tpu.memory_space<vmem>>, vector<136x1xf32>
    %1 = vector.extract_strided_slice %0 {offsets = [0, 0], sizes = [64, 1], strides = [1, 1]} : vector<136x1xf32> to vector<64x1xf32>
    %2 = vector.extract_strided_slice %0 {offsets = [64, 0], sizes = [32, 1], strides = [1, 1]} : vector<136x1xf32> to vector<32x1xf32>
    %3 = vector.extract_strided_slice %0 {offsets = [96, 0], sizes = [32, 1], strides = [1, 1]} : vector<136x1xf32> to vector<32x1xf32>
    %4 = vector.extract_strided_slice %0 {offsets = [128, 0], sizes = [1, 1], strides = [1, 1]} : vector<136x1xf32> to vector<1x1xf32>
    %c0_1 = arith.constant 0 : index
    %c0_2 = arith.constant 0 : index
    %5 = vector.load %arg2[%c0_1, %c0_2] : memref<64x16xbf16, #tpu.memory_space<vmem>>, vector<64x16xbf16>
    %c0_3 = arith.constant 0 : index
    %c0_4 = arith.constant 0 : index
    %6 = vector.load %arg1[%c0_3, %c0_4] : memref<16x256xbf16, #tpu.memory_space<vmem>>, vector<16x256xbf16>
    %cst = arith.constant dense<0.000000e+00> : vector<64x256xf32>
    %7 = tpu.matmul %5, %6, %cst {dimension_numbers = #tpu.dot_dimension_numbers<[1], [0], [0], [1], [0, 0, 1, 1], [], []>} : vector<64x16xbf16>, vector<16x256xbf16>, vector<64x256xf32> -> vector<64x256xf32>
    %8 = vector.broadcast %1 : vector<64x1xf32> to vector<64x256xf32>
    %9 = arith.addf %7, %8 : vector<64x256xf32>
    %cst_5 = arith.constant 0.000000e+00 : f32
    %10 = vector.broadcast %cst_5 : f32 to vector<64x256xf32>
    %11 = arith.maximumf %9, %10 : vector<64x256xf32>
    %c0_6 = arith.constant 0 : index
    %c0_7 = arith.constant 0 : index
    %12 = vector.load %arg3[%c0_6, %c0_7] : memref<32x64xbf16, #tpu.memory_space<vmem>>, vector<32x64xbf16>
    %13 = arith.truncf %11 : vector<64x256xf32> to vector<64x256xbf16>
    %cst_8 = arith.constant dense<0.000000e+00> : vector<32x256xf32>
    %14 = tpu.matmul %12, %13, %cst_8 {dimension_numbers = #tpu.dot_dimension_numbers<[1], [0], [0], [1], [0, 0, 1, 1], [], []>} : vector<32x64xbf16>, vector<64x256xbf16>, vector<32x256xf32> -> vector<32x256xf32>
    %15 = vector.broadcast %2 : vector<32x1xf32> to vector<32x256xf32>
    %16 = arith.addf %14, %15 : vector<32x256xf32>
    %cst_9 = arith.constant 0.000000e+00 : f32
    %17 = vector.broadcast %cst_9 : f32 to vector<32x256xf32>
    %18 = arith.maximumf %16, %17 : vector<32x256xf32>
    %19 = vector.broadcast %3 : vector<32x1xf32> to vector<32x256xf32>
    %20 = arith.mulf %18, %19 : vector<32x256xf32>
    %cst_10 = arith.constant dense<0.000000e+00> : vector<256xf32>
    %21 = vector.multi_reduction <add>, %20, %cst_10 [0] : vector<32x256xf32> to vector<256xf32>
    %22 = vector.shape_cast %21 : vector<256xf32> to vector<1x256xf32>
    %23 = vector.broadcast %4 : vector<1x1xf32> to vector<1x256xf32>
    %24 = arith.addf %22, %23 : vector<1x256xf32>
    %c0_11 = arith.constant 0 : index
    %c0_12 = arith.constant 0 : index
    %25 = vector.load %arg5[%c0_11, %c0_12] : memref<1x256xf32, #tpu.memory_space<vmem>>, vector<1x256xf32>
    tpu.vector_store %arg5[%c0_11, %c0_12], %24 {strides = array<i32>} : memref<1x256xf32, #tpu.memory_space<vmem>>, vector<1x256xf32>,
    return
  }
  func.func @transform_0(%arg0: i32) -> (i32, i32) {
    %c0_i32 = arith.constant 0 : i32
    %c0_i32_0 = arith.constant 0 : i32
    return %c0_i32, %arg0 : i32, i32
  }
  func.func @transform_1(%arg0: i32) -> (i32, i32) {
    %c0_i32 = arith.constant 0 : i32
    %c0_i32_0 = arith.constant 0 : i32
    %c0_i32_1 = arith.constant 0 : i32
    return %c0_i32, %c0_i32_0 : i32, i32
  }
  func.func @transform_2(%arg0: i32) -> (i32, i32) {
    %c0_i32 = arith.constant 0 : i32
    %c0_i32_0 = arith.constant 0 : i32
    %c0_i32_1 = arith.constant 0 : i32
    return %c0_i32, %c0_i32_0 : i32, i32
  }
  func.func @transform_3(%arg0: i32) -> (i32, i32) {
    %c0_i32 = arith.constant 0 : i32
    %c0_i32_0 = arith.constant 0 : i32
    %c0_i32_1 = arith.constant 0 : i32
    return %c0_i32, %c0_i32_0 : i32, i32
  }
  func.func @transform_4(%arg0: i32) -> (i32, i32) {
    %c0_i32 = arith.constant 0 : i32
    %c0_i32_0 = arith.constant 0 : i32
    return %c0_i32, %arg0 : i32, i32
  }
}

</mosaic_0001>

<llo_original>
// kernel: tpu_custom_call.1
$region0: #{tpu_custom_call.1}
  #allocation0 [shape = 'u32[]', space=smem, size = 0x4, offset = 0x4, fixed_abs, tag = 'smem constant byte address 0x4 - core index']
  #allocation1 [shape = 'u32[144,128]{1,0:T(1,128)}', space=vmem, size = 0x12000, scoped, tag = 'internal scratch']
  %s0 = inlined_call_operand.vmem [shape: bf16[16,256], index: 0, kind: input, shape index: {}]
  %s1 = inlined_call_operand.vmem [shape: bf16[64,16], index: 1, kind: input, shape index: {}]
  %s2 = inlined_call_operand.vmem [shape: bf16[32,64], index: 2, kind: input, shape index: {}]
  %s3 = inlined_call_operand.vmem [shape: f32[136,1], index: 3, kind: input, shape index: {}]
  %s4 = inlined_call_operand.hbm [shape: f32[1,256], index: 4, kind: output, shape index: {}]
  %s5 = sld [smem:[#allocation0]]
  $region26: #{tpu_custom_call.1} parent=0
    _
  %s7 = ssub.s32 1, %s5
  %s8 = scalar_select 0, %s7, %s5
  $region1: #{tpu_custom_call.1} parent=0
    #allocation2 [shape = 'u8[1024]{0}', space=vmem, size = 0x400, scoped, tag = 'output window, operand 0, single buffered']
    #allocation3 [shape = 's32[1]{0}', space=sflag, size = 0x4, scoped, tag = 'scoped memory for tpu_custom_call.1']
    %9 = vsyncpa [#allocation3], 0
    // Predicated region
    $region2: #{tpu_custom_call.1} parent=1 // pred_check
      _
    $region3: #{tpu_custom_call.1} parent=1 // pred_check_branch
      %11 = sbr.rel (0) target = $region5
    $region4: #{tpu_custom_call.1} parent=1 // pred_region
      _
    $region5: #{tpu_custom_call.1} parent=1 // pred_fallthru
      _
    // Predicated region
    $region6: #{tpu_custom_call.1} parent=1 // pred_check
      _
    $region7: #{tpu_custom_call.1} parent=1 // pred_check_branch
      %13 = sbr.rel (0) target = $region9
    $region8: #{tpu_custom_call.1} parent=1 // pred_region
      _
    $region9: #{tpu_custom_call.1} parent=1 // pred_fallthru
      _
    // Predicated region
    $region10: #{tpu_custom_call.1} parent=1 // pred_check
      _
    $region11: #{tpu_custom_call.1} parent=1 // pred_check_branch
      %15 = sbr.rel (0) target = $region13
    $region12: #{tpu_custom_call.1} parent=1 // pred_region
      _
    $region13: #{tpu_custom_call.1} parent=1 // pred_fallthru
      _
    // Predicated region
    $region14: #{tpu_custom_call.1} parent=1 // pred_check
      _
    $region15: #{tpu_custom_call.1} parent=1 // pred_check_branch
      %17 = sbr.rel (0) target = $region17
    $region16: #{tpu_custom_call.1} parent=1 // pred_region
      _
    $region17: #{tpu_custom_call.1} parent=1 // pred_fallthru
      _
    %v19 = vld [vmem:[%s3] sm:$0xff]
    %v20 = vld [vmem:[%s3 + $0x8] sm:$0xff]
    %v21 = vld [vmem:[%s3 + $0x10] sm:$0xff]
    %v22 = vld [vmem:[%s3 + $0x18] sm:$0xff]
    %v23 = vld [vmem:[%s3 + $0x20] sm:$0xff]
    %v24 = vld [vmem:[%s3 + $0x28] sm:$0xff]
    %v25 = vld [vmem:[%s3 + $0x30] sm:$0xff]
    %v26 = vld [vmem:[%s3 + $0x38] sm:$0xff]
    %v27 = vld [vmem:[%s3 + $0x40] sm:$0xff]
    %v28 = vld [vmem:[%s3 + $0x48] sm:$0xff]
    %v29 = vld [vmem:[%s3 + $0x50] sm:$0xff]
    %v30 = vld [vmem:[%s3 + $0x58] sm:$0xff]
    %v31 = vld [vmem:[%s3 + $0x60] sm:$0xff]
    %v32 = vld [vmem:[%s3 + $0x68] sm:$0xff]
    %v33 = vld [vmem:[%s3 + $0x70] sm:$0xff]
    %v34 = vld [vmem:[%s3 + $0x78] sm:$0xff]
    %v35 = vld [vmem:[%s3 + $0x80] sm:$0xff]
    %v36 = vld [vmem:[%s1] sm:$0xf]
    %v37 = vld [vmem:[%s1 + $0x4] sm:$0xf]
    %v38 = vld [vmem:[%s1 + $0x8] sm:$0xf]
    %v39 = vld [vmem:[%s1 + $0xc] sm:$0xf]
    %v40 = vld [vmem:[%s1 + $0x10] sm:$0xf]
    %v41 = vld [vmem:[%s1 + $0x14] sm:$0xf]
    %v42 = vld [vmem:[%s1 + $0x18] sm:$0xf]
    %v43 = vld [vmem:[%s1 + $0x1c] sm:$0xf]
    %v44 = vld [vmem:[%s0] sm:$0xff]
    %v45 = vld [vmem:[%s0 + $0x8] sm:$0xff]
    %47 = vset.pattern.permute.xlu0 0
    %48 = vperm.xlu0 %47, %v19
    %v49 = vpop.permute.xlu0 %48
    %52 = vset.pattern.permute.xlu0 0
    %53 = vperm.xlu0 %52, %v20
    %v54 = vpop.permute.xlu0 %53
    %57 = vset.pattern.permute.xlu0 0
    %58 = vperm.xlu0 %57, %v21
    %v59 = vpop.permute.xlu0 %58
    %62 = vset.pattern.permute.xlu0 0
    %63 = vperm.xlu0 %62, %v22
    %v64 = vpop.permute.xlu0 %63
    %67 = vset.pattern.permute.xlu0 0
    %68 = vperm.xlu0 %67, %v23
    %v69 = vpop.permute.xlu0 %68
    %72 = vset.pattern.permute.xlu0 0
    %73 = vperm.xlu0 %72, %v24
    %v74 = vpop.permute.xlu0 %73
    %77 = vset.pattern.permute.xlu0 0
    %78 = vperm.xlu0 %77, %v25
    %v79 = vpop.permute.xlu0 %78
    %82 = vset.pattern.permute.xlu0 0
    %83 = vperm.xlu0 %82, %v26
    %v84 = vpop.permute.xlu0 %83
    %v94 = vunpack.c.l.b16 %v36
    %v95 = vunpack.c.l.b16 %v37
    %v96 = vunpack.c.l.b16 %v38
    %v97 = vunpack.c.l.b16 %v39
    %v98 = vunpack.c.l.b16 %v40
    %v99 = vunpack.c.l.b16 %v41
    %v100 = vunpack.c.l.b16 %v42
    %v101 = vunpack.c.l.b16 %v43
    %v102 = vpack.c.b16 %v95, %v94
    %v103 = vpack.c.b16 %v97, %v96
    %v104 = vpack.c.b16 %v99, %v98
    %v105 = vpack.c.b16 %v101, %v100
    %v108 = vunpack.c.l.b16 %v44
    %v109 = vunpack.c.h.b16 %v44
    %v110 = vunpack.c.l.b16 %v45
    %v111 = vunpack.c.h.b16 %v45
    %v112 = vpack.c.b16 %v110, %v108
    %v113 = vpack.c.b16 %v111, %v109
    %vm116 = vcmask 130048
    %v118 = vsel %vm116, %v102, 0
    %v121 = vsel %vm116, %v103, 0
    %v124 = vsel %vm116, %v104, 0
    %v127 = vsel %vm116, %v105, 0
    %129 = vmatprep.subr.bf16.mxu0 %v113
    %130 = vmatpush1.bf16.msra.mxu0 %v112
    %131 = vmatprep.subr.bf16.mxu0 0
    %132 = vmatpush1.bf16.msra.mxu0 0
    %133 = vmatprep.subr.bf16.mxu0 0
    %134 = vmatpush1.bf16.msra.mxu0 0
    %135 = vmatprep.subr.bf16.mxu0 0
    %136 = vmatpush1.bf16.msra.mxu0 0
    %137 = vmatprep.subr.bf16.mxu0 0
    %138 = vmatpush1.bf16.msra.mxu0 0
    %139 = vmatprep.subr.bf16.mxu0 0
    %140 = vmatpush1.bf16.msra.mxu0 0
    %141 = vmatprep.subr.bf16.mxu0 0
    %142 = vmatpush1.bf16.msra.mxu0 0
    %143 = vmatprep.subr.bf16.mxu0 0
    %144 = vmatpush1.bf16.msra.mxu0 0
    %145 = vmatprep.subr.bf16.mxu0 0
    %146 = vmatpush1.bf16.msra.mxu0 0
    %147 = vmatprep.subr.bf16.mxu0 0
    %148 = vmatpush1.bf16.msra.mxu0 0
    %149 = vmatprep.subr.bf16.mxu0 0
    %150 = vmatpush1.bf16.msra.mxu0 0
    %151 = vmatprep.subr.bf16.mxu0 0
    %152 = vmatpush1.bf16.msra.mxu0 0
    %153 = vmatprep.subr.bf16.mxu0 0
    %154 = vmatpush1.bf16.msra.mxu0 0
    %155 = vmatprep.subr.bf16.mxu0 0
    %156 = vmatpush1.bf16.msra.mxu0 0
    %157 = vmatprep.subr.bf16.mxu0 0
    %158 = vmatpush1.bf16.msra.mxu0 0
    %159 = vmatprep.subr.bf16.mxu0 0
    %160 = vmatpush1.bf16.msra.mxu0 0
    %161 = vmatprep.mubr.bf16.mxu0 0
    %162 = vmatmul.mubr.bf16.gmra.mrb[0].mxu0 %v118
    %v163 = vpop.f32.mrb[0].mxu0
    %v164 = vadd.f32 %v49, %v163
    %v165 = vpop.f32.mrb[0].mxu0
    %v166 = vadd.f32 %v49, %v165
    %v167 = vpop.f32.mrb[0].mxu0
    %v168 = vadd.f32 %v54, %v167
    %v169 = vpop.f32.mrb[0].mxu0
    %v170 = vadd.f32 %v54, %v169
    %171 = vmatprep.mubr.bf16.mxu0 0
    %172 = vmatmul.mubr.bf16.gmra.mrb[0].mxu0 %v121
    %v173 = vpop.f32.mrb[0].mxu0
    %v174 = vadd.f32 %v59, %v173
    %v175 = vpop.f32.mrb[0].mxu0
    %v176 = vadd.f32 %v59, %v175
    %v177 = vpop.f32.mrb[0].mxu0
    %v178 = vadd.f32 %v64, %v177
    %v179 = vpop.f32.mrb[0].mxu0
    %v180 = vadd.f32 %v64, %v179
    %181 = vmatprep.mubr.bf16.mxu0 0
    %182 = vmatmul.mubr.bf16.gmra.mrb[0].mxu0 %v124
    %v183 = vpop.f32.mrb[0].mxu0
    %v184 = vadd.f32 %v69, %v183
    %v185 = vpop.f32.mrb[0].mxu0
    %v186 = vadd.f32 %v69, %v185
    %v187 = vpop.f32.mrb[0].mxu0
    %v188 = vadd.f32 %v74, %v187
    %v189 = vpop.f32.mrb[0].mxu0
    %v190 = vadd.f32 %v74, %v189
    %191 = vmatprep.mubr.bf16.mxu0 0
    %192 = vmatmul.mubr.bf16.gmra.mrb[0].mxu0 %v127
    %v193 = vpop.f32.mrb[0].mxu0
    %v194 = vadd.f32 %v79, %v193
    %v195 = vpop.f32.mrb[0].mxu0
    %v196 = vadd.f32 %v79, %v195
    %v197 = vpop.f32.mrb[0].mxu0
    %v198 = vadd.f32 %v84, %v197
    %v199 = vpop.f32.mrb[0].mxu0
    %v200 = vadd.f32 %v84, %v199
    %201 = vdwg.mxu0
    %v202 = vmax.f32 %v164, 0.0
    %v203 = vmax.f32 %v166, 0.0
    %v204 = vmax.f32 %v168, 0.0
    %v205 = vmax.f32 %v170, 0.0
    %v206 = vmax.f32 %v174, 0.0
    %v207 = vmax.f32 %v176, 0.0
    %v208 = vmax.f32 %v178, 0.0
    %v209 = vmax.f32 %v180, 0.0
    %v210 = vmax.f32 %v184, 0.0
    %v211 = vmax.f32 %v186, 0.0
    %v212 = vmax.f32 %v188, 0.0
    %v213 = vmax.f32 %v190, 0.0
    %v214 = vmax.f32 %v194, 0.0
    %v215 = vmax.f32 %v196, 0.0
    %v216 = vmax.f32 %v198, 0.0
    %v217 = vmax.f32 %v200, 0.0
    %v218 = vld [vmem:[%s2] sm:$0xf]
    %v219 = vld [vmem:[%s2 + $0x4] sm:$0xf]
    %v220 = vld [vmem:[%s2 + $0x8] sm:$0xf]
    %v221 = vld [vmem:[%s2 + $0xc] sm:$0xf]
    %v222 = vpack.c.bf16 %v204, %v202
    %v223 = vpack.c.bf16 %v205, %v203
    %v224 = vpack.c.bf16 %v208, %v206
    %v225 = vpack.c.bf16 %v209, %v207
    %v226 = vpack.c.bf16 %v212, %v210
    %v227 = vpack.c.bf16 %v213, %v211
    %v228 = vpack.c.bf16 %v216, %v214
    %v229 = vpack.c.bf16 %v217, %v215
    %231 = vset.pattern.permute.xlu0 0
    %232 = vperm.xlu0 %231, %v27
    %v233 = vpop.permute.xlu0 %232
    %236 = vset.pattern.permute.xlu0 0
    %237 = vperm.xlu0 %236, %v28
    %v238 = vpop.permute.xlu0 %237
    %241 = vset.pattern.permute.xlu0 0
    %242 = vperm.xlu0 %241, %v29
    %v243 = vpop.permute.xlu0 %242
    %246 = vset.pattern.permute.xlu0 0
    %247 = vperm.xlu0 %246, %v30
    %v248 = vpop.permute.xlu0 %247
    %v254 = vunpack.c.l.b16 %v218
    %v255 = vunpack.c.l.b16 %v219
    %v256 = vunpack.c.l.b16 %v220
    %v257 = vunpack.c.l.b16 %v221
    %v258 = vpack.c.b16 %v255, %v254
    %v259 = vpack.c.b16 %v257, %v256
    %vm260 = vcmask 523264
    %v262 = vsel %vm260, %v258, 0
    %v265 = vsel %vm260, %v259, 0
    %267 = vmatprep.subr.bf16.mxu0 %v223
    %268 = vmatpush1.bf16.msra.mxu0 %v222
    %269 = vmatprep.subr.bf16.mxu0 %v225
    %270 = vmatpush1.bf16.msra.mxu0 %v224
    %271 = vmatprep.subr.bf16.mxu0 %v227
    %272 = vmatpush1.bf16.msra.mxu0 %v226
    %273 = vmatprep.subr.bf16.mxu0 %v229
    %274 = vmatpush1.bf16.msra.mxu0 %v228
    %275 = vmatprep.subr.bf16.mxu0 0
    %276 = vmatpush1.bf16.msra.mxu0 0
    %277 = vmatprep.subr.bf16.mxu0 0
    %278 = vmatpush1.bf16.msra.mxu0 0
    %279 = vmatprep.subr.bf16.mxu0 0
    %280 = vmatpush1.bf16.msra.mxu0 0
    %281 = vmatprep.subr.bf16.mxu0 0
    %282 = vmatpush1.bf16.msra.mxu0 0
    %283 = vmatprep.subr.bf16.mxu0 0
    %284 = vmatpush1.bf16.msra.mxu0 0
    %285 = vmatprep.subr.bf16.mxu0 0
    %286 = vmatpush1.bf16.msra.mxu0 0
    %287 = vmatprep.subr.bf16.mxu0 0
    %288 = vmatpush1.bf16.msra.mxu0 0
    %289 = vmatprep.subr.bf16.mxu0 0
    %290 = vmatpush1.bf16.msra.mxu0 0
    %291 = vmatprep.subr.bf16.mxu0 0
    %292 = vmatpush1.bf16.msra.mxu0 0
    %293 = vmatprep.subr.bf16.mxu0 0
    %294 = vmatpush1.bf16.msra.mxu0 0
    %295 = vmatprep.subr.bf16.mxu0 0
    %296 = vmatpush1.bf16.msra.mxu0 0
    %297 = vmatprep.subr.bf16.mxu0 0
    %298 = vmatpush1.bf16.msra.mxu0 0
    %299 = vmatprep.mubr.bf16.mxu0 0
    %300 = vmatmul.mubr.bf16.gmra.mrb[0].mxu0 %v262
    %v301 = vpop.f32.mrb[0].mxu0
    %v302 = vadd.f32 %v233, %v301
    %v303 = vpop.f32.mrb[0].mxu0
    %v304 = vadd.f32 %v233, %v303
    %v305 = vpop.f32.mrb[0].mxu0
    %v306 = vadd.f32 %v238, %v305
    %v307 = vpop.f32.mrb[0].mxu0
    %v308 = vadd.f32 %v238, %v307
    %309 = vmatprep.mubr.bf16.mxu0 0
    %310 = vmatmul.mubr.bf16.gmra.mrb[0].mxu0 %v265
    %v311 = vpop.f32.mrb[0].mxu0
    %v312 = vadd.f32 %v243, %v311
    %v313 = vpop.f32.mrb[0].mxu0
    %v314 = vadd.f32 %v243, %v313
    %v315 = vpop.f32.mrb[0].mxu0
    %v316 = vadd.f32 %v248, %v315
    %v317 = vpop.f32.mrb[0].mxu0
    %v318 = vadd.f32 %v248, %v317
    %319 = vdwg.mxu0
    %v320 = vmax.f32 %v302, 0.0
    %v321 = vmax.f32 %v304, 0.0
    %v322 = vmax.f32 %v306, 0.0
    %v323 = vmax.f32 %v308, 0.0
    %v324 = vmax.f32 %v312, 0.0
    %v325 = vmax.f32 %v314, 0.0
    %v326 = vmax.f32 %v316, 0.0
    %v327 = vmax.f32 %v318, 0.0
    %329 = vset.pattern.permute.xlu0 0
    %330 = vperm.xlu0 %329, %v31
    %v331 = vpop.permute.xlu0 %330
    %334 = vset.pattern.permute.xlu0 0
    %335 = vperm.xlu0 %334, %v32
    %v336 = vpop.permute.xlu0 %335
    %339 = vset.pattern.permute.xlu0 0
    %340 = vperm.xlu0 %339, %v33
    %v341 = vpop.permute.xlu0 %340
    %344 = vset.pattern.permute.xlu0 0
    %345 = vperm.xlu0 %344, %v34
    %v346 = vpop.permute.xlu0 %345
    %v348 = vmul.f32 %v320, %v331
    %v349 = vmul.f32 %v321, %v331
    %v350 = vmul.f32 %v322, %v336
    %v351 = vmul.f32 %v323, %v336
    %v352 = vmul.f32 %v324, %v341
    %v353 = vmul.f32 %v325, %v341
    %v354 = vmul.f32 %v326, %v346
    %v355 = vmul.f32 %v327, %v346
    %v356 = vadd.f32 %v348, %v350
    %v357 = vadd.f32 %v356, %v352
    %v358 = vadd.f32 %v357, %v354
    %v359 = vrot.slane %v358, 4
    %v360 = vadd.f32 %v358, %v359
    %v361 = vrot.slane %v360, 2
    %v362 = vadd.f32 %v360, %v361
    %v363 = vrot.slane %v362, 1
    %v364 = vadd.f32 %v362, %v363
    %v365 = vadd.f32 %v349, %v351
    %v366 = vadd.f32 %v365, %v353
    %v367 = vadd.f32 %v366, %v355
    %v368 = vrot.slane %v367, 4
    %v369 = vadd.f32 %v367, %v368
    %v370 = vrot.slane %v369, 2
    %v371 = vadd.f32 %v369, %v370
    %v372 = vrot.slane %v371, 1
    %v373 = vadd.f32 %v371, %v372
    %375 = vset.pattern.permute.xlu0 0
    %376 = vperm.xlu0 %375, %v35
    %v377 = vpop.permute.xlu0 %376
    %v379 = vadd.f32 %v364, %v377
    %v380 = vadd.f32 %v373, %v377
    %v383 = vcombine.low %v379, %v380
    %v385 = vunpack.c.l.s4 1966171168
    %v386 = vunpack.c.0.s8 %v385
    %v387 = vlaneseq
    %v388 = vshrl.u32 %v387, 7
    %v389 = vsub.s32 %v386, %v388
    %v390 = vrot.slane %v383, %v389
    %v392 = vunpack.c.l.s4 1966171168
    %v393 = vunpack.c.0.s8 %v392
    %v394 = vlaneseq
    %v395 = vshrl.u32 %v394, 7
    %v396 = vsub.s32 %v393, %v395
    %v397 = vrot.slane %v390, %v396
    %v399 = vlaneseq
    %vm400 = vcmp.ge.s32.totalorder %v399, 0
    %vm401 = vcmp.lt.s32.totalorder %v399, 256
    %vm402 = vmand %vm400, %vm401
    %403 = vst.msk [vmem:[#allocation2] sm:$0x3] %vm402, %v397
    // Predicated region
    $region18: #{tpu_custom_call.1} parent=1 // pred_check
      _
    $region19: #{tpu_custom_call.1} parent=1 // pred_check_branch
      %405 = sbr.rel (0) target = $region21
    $region20: #{tpu_custom_call.1} parent=1 // pred_region
      %s407 = ssub.s32 32, 32
      %408 = vsyncadd [#allocation3], %s407
      %s410 = sshll.u32 [#allocation2], 4
      %s411 = int_to_ptr.vmem [resolvable:$true] %s410
      %413 = dma.vmem_to_hbm [thread:$0]  %s411, 32, %s4, [#allocation3]
    $region21: #{tpu_custom_call.1} parent=1 // pred_fallthru
      _
    // Predicated region
    $region22: #{tpu_custom_call.1} parent=1 // pred_check
      _
    $region23: #{tpu_custom_call.1} parent=1 // pred_check_branch
      %415 = sbr.rel (0) target = $region25
    $region24: #{tpu_custom_call.1} parent=1 // pred_region
      %416 = dma.done [#allocation3], 32
    $region25: #{tpu_custom_call.1} parent=1 // pred_fallthru
      _
    %417 = vsyncpa [#allocation3], 1

</llo_original>
